<compile_context>
chip_gen: v5e
topology: v5e:2x2
jax: 0.10.0
libtpu: 0.0.40
codegen_flags: <defaults>
</compile_context>

<pallas_src>
import jax
import jax.numpy as jnp
from jax import lax
from jax.experimental import pallas as pl
from jax.experimental.pallas import tpu as pltpu


def _round_up(x, m):
    return ((x + m - 1) // m) * m


def _choose_lane_tile(nc, elems_per_lane, itemsize):
    """Pick lane tile LT (multiple of 128) and padded channel count NCp."""
    ncp = _round_up(max(nc, 1), 128)
    # Double-buffered (in + out) working set kept well under the scoped VMEM
    # limit on every generation (v7x has only 64 MiB physical per TC).
    budget = 16 * 1024 * 1024
    cap = budget // max(1, 2 * elems_per_lane * itemsize)
    cap = max(128, (cap // 128) * 128)
    lt = min(ncp, cap)
    # Prefer >= 2 grid steps when there are enough channels (v7x megacore).
    if ncp > 128 and lt >= ncp:
        lt = _round_up(pl.cdiv(ncp, 2), 128)
    ncp = _round_up(ncp, lt)
    return lt, ncp


def _make_stride1_kernel(pool_type):
    """3x3 / stride 1 / padding 1 pooling on a (H, W, L) lane-dense tile."""
    is_max = pool_type == "max"
    fill = float("-inf") if is_max else 0.0
    op = jnp.maximum if is_max else jnp.add

    def kernel(x_ref, o_ref):
        x = x_ref[...]                                   # (H, W, L)
        h, w, l = x.shape
        dt = x.dtype
        # --- 1x3 pass along W (sublane dim), halo = fill ---
        zc = jnp.full((h, 1, l), fill, dt)
        left = jnp.concatenate([zc, x[:, : w - 1, :]], axis=1)   # x[:, j-1]
        right = jnp.concatenate([x[:, 1:, :], zc], axis=1)       # x[:, j+1]
        r = op(op(x, left), right)
        # --- 3x1 pass along H (outer dim), halo = fill ---
        zr = jnp.full((1, w, l), fill, dt)
        up = jnp.concatenate([zr, r[: h - 1]], axis=0)           # r[i-1]
        down = jnp.concatenate([r[1:], zr], axis=0)              # r[i+1]
        y = op(op(r, up), down)
        if not is_max:
            y = y * jnp.asarray(1.0 / 9.0, dt)                   # count_include_pad
        o_ref[...] = y.astype(o_ref.dtype)

    return kernel


def _make_stride2_kernel(pool_type):
    """Fused ZeroPad2d(16) + 3x3 / stride 2 / padding 1 pooling.

    Input tile : (H, W/2, 2*L)  -- W-parity folded into the lane dim
                 lanes [0:L) = even W columns, [L:2L) = odd W columns.
    Output tile: (H/2+16, W/2+16, L) -- final pooled map incl. zero frame.

    Every out-of-range tap is 0 (the ZeroPad2d zeros); the -inf padding=1 halo
    of MaxPool never matters because any window touching it also contains
    ZeroPad zeros, and the real data is >= 17 pixels away from that halo.
    """
    is_max = pool_type == "max"
    op = jnp.maximum if is_max else jnp.add

    def kernel(x_ref, o_ref):
        x = x_ref[...]                                   # (H, W2, 2L)
        h, w2, l2 = x.shape
        lt = o_ref.shape[-1]
        h2 = h // 2
        nh, nw = h2 + 1, w2 + 1
        dt = x.dtype

        # --- rows: centers ci = 2k, taps 2k-1, 2k, 2k+1 (OOR -> 0) ---
        xr = x.reshape(h2, 2, w2, l2)                    # outer-dim regroup only
        xe = xr[:, 0]                                    # even rows (h2, w2, 2L)
        xo = xr[:, 1]                                    # odd rows
        zr = jnp.zeros((1, w2, l2), dt)
        a0 = jnp.concatenate([xe, zr], axis=0)           # row 2k
        am = jnp.concatenate([zr, xo], axis=0)           # row 2k-1
        ap = jnp.concatenate([xo, zr], axis=0)           # row 2k+1
        r = op(op(a0, am), ap)                           # (nh, w2, 2L)

        # --- cols: centers cj = 2m, taps 2m-1, 2m, 2m+1 (OOR -> 0) ---
        re = r[:, :, :lt]                                # even W columns
        ro = r[:, :, lt:]                                # odd W columns
        zc = jnp.zeros((nh, 1, lt), dt)
        b0 = jnp.concatenate([re, zc], axis=1)           # col 2m
        bm = jnp.concatenate([zc, ro], axis=1)           # col 2m-1
        bp = jnp.concatenate([ro, zc], axis=1)           # col 2m+1
        y = op(op(b0, bm), bp)                           # (nh, nw, L)
        if not is_max:
            y = y * jnp.asarray(1.0 / 9.0, dt)

        # zero frame (windows fully inside the ZeroPad2d region) + center block
        o_ref[...] = jnp.zeros(o_ref.shape, o_ref.dtype)
        o_ref[8:8 + nh, 8:8 + nw, :] = y.astype(o_ref.dtype)

    return kernel


def pooling_forward(x, pool_type, strides):
    """Equivalent of Pooling(in_channels, type, strides, size=3).forward."""
    assert pool_type in ("max", "average")
    assert strides in (1, 2)
    N, C, H, W = x.shape
    NC = N * C
    itemsize = jnp.dtype(x.dtype).itemsize

    # Lane-dense layout: channels on the lane (last) dim.
    x_l = jnp.transpose(x, (2, 3, 0, 1)).reshape(H, W, NC)

    if strides == 1:
        lt, ncp = _choose_lane_tile(NC, 2 * H * W, itemsize)
        n_tiles = ncp // lt
        xp = jnp.pad(x_l, ((0, 0), (0, 0), (0, ncp - NC)))
        cost = pl.CostEstimate(flops=8 * H * W * ncp, transcendentals=0,
                               bytes_accessed=2 * H * W * ncp * itemsize)
        y = pl.pallas_call(
            _make_stride1_kernel(pool_type),
            out_shape=jax.ShapeDtypeStruct((H, W, ncp), x.dtype),
            grid=(n_tiles,),
            in_specs=[pl.BlockSpec((H, W, lt), lambda t: (0, 0, t))],
            out_specs=pl.BlockSpec((H, W, lt), lambda t: (0, 0, t)),
            compiler_params=pltpu.CompilerParams(
                dimension_semantics=("parallel",),
                vmem_limit_bytes=48 * 1024 * 1024),
            cost_estimate=cost,
        )(xp)
        y = y[:, :, :NC]
        return jnp.transpose(y.reshape(H, W, N, C), (2, 3, 0, 1))

    # strides == 2: fused ZeroPad2d(16) + pool(3, 2, padding=1) + subsample.
    # TODO(synk): stride-2 fused path assumes even H/W (true for CIFAR 32x32).
    assert H % 2 == 0 and W % 2 == 0, "stride-2 path assumes even spatial dims"
    Ho, Wo = H // 2 + 16, W // 2 + 16
    lt, ncp = _choose_lane_tile(NC, H * W + Ho * Wo, itemsize)
    n_tiles = ncp // lt
    xp = jnp.pad(x_l, ((0, 0), (0, 0), (0, ncp - NC)))
    # Fold W parity into the lane dim, per lane tile:
    # (H, W, ncp) -> (H, W/2, n_tiles * 2 * lt), lanes = [even cols | odd cols].
    xp = xp.reshape(H, W // 2, 2, n_tiles, lt)
    xp = jnp.transpose(xp, (0, 1, 3, 2, 4)).reshape(H, W // 2, n_tiles * 2 * lt)
    cost = pl.CostEstimate(flops=8 * Ho * Wo * ncp, transcendentals=0,
                           bytes_accessed=(H * W + Ho * Wo) * ncp * itemsize)
    y = pl.pallas_call(
        _make_stride2_kernel(pool_type),
        out_shape=jax.ShapeDtypeStruct((Ho, Wo, ncp), x.dtype),
        grid=(n_tiles,),
        in_specs=[pl.BlockSpec((H, W // 2, 2 * lt), lambda t: (0, 0, t))],
        out_specs=pl.BlockSpec((Ho, Wo, lt), lambda t: (0, 0, t)),
        compiler_params=pltpu.CompilerParams(
            dimension_semantics=("parallel",),
            vmem_limit_bytes=48 * 1024 * 1024),
        cost_estimate=cost,
    )(xp)
    y = y[:, :, :NC]
    return jnp.transpose(y.reshape(Ho, Wo, N, C), (2, 3, 0, 1))


def _reference(x, pool_type, strides):
    """Pure-JAX reference (lax.reduce_window) mirroring the PyTorch module."""
    if strides == 2:
        x = jnp.pad(x, ((0, 0), (0, 0), (16, 16), (16, 16)))
    if pool_type == "max":
        return lax.reduce_window(
            x, -jnp.inf, lax.max,
            window_dimensions=(1, 1, 3, 3),
            window_strides=(1, 1, strides, strides),
            padding=((0, 0), (0, 0), (1, 1), (1, 1)))
    s = lax.reduce_window(
        x, 0.0, lax.add,
        window_dimensions=(1, 1, 3, 3),
        window_strides=(1, 1, strides, strides),
        padding=((0, 0), (0, 0), (1, 1), (1, 1)))
    return s / 9.0


if __name__ == "__main__":
    key = jax.random.PRNGKey(0)
    N, C, H, W = 2, 4, 16, 16
    x = jax.random.normal(key, (N, C, H, W), dtype=jnp.float32)

    for pool_type in ("max", "average"):
        for strides in (1, 2):
            out = pooling_forward(x, pool_type, strides)
            out = jax.block_until_ready(out)
            ref = _reference(x, pool_type, strides)
            assert out.shape == ref.shape, (pool_type, strides, out.shape, ref.shape)
            assert jnp.allclose(out, ref, atol=1e-5, rtol=1e-5), (pool_type, strides)

    print("KERNEL_OK")
</pallas_src>

<mosaic_0001>
module attributes {stable_mosaic.version = 11 : i64} {
  func.func @kernel(%arg0: i32, %arg1: memref<16x16x128xf32, #tpu.memory_space<vmem>>, %arg2: memref<16x16x128xf32, #tpu.memory_space<vmem>>) attributes {dimension_semantics = [#tpu.dimension_semantics<parallel>], iteration_bounds = array<i64: 1>, scalar_prefetch = 0 : i64, scratch_operands = 0 : i64, tpu.core_type = #tpu.core_type<tc>, window_params = [{transform_indices = @transform_0, window_bounds = array<i64: 16, 16, 128>}, {transform_indices = @transform_1, window_bounds = array<i64: 16, 16, 128>}]} {
    %c0 = arith.constant 0 : index
    %c0_0 = arith.constant 0 : index
    %c0_1 = arith.constant 0 : index
    %0 = vector.load %arg1[%c0, %c0_0, %c0_1] : memref<16x16x128xf32, #tpu.memory_space<vmem>>, vector<16x16x128xf32>
    %cst = arith.constant 0xFF800000 : f32
    %1 = vector.broadcast %cst : f32 to vector<16x1x128xf32>
    %2 = vector.extract_strided_slice %0 {offsets = [0, 0, 0], sizes = [16, 15, 128], strides = [1, 1, 1]} : vector<16x16x128xf32> to vector<16x15x128xf32>
    %3 = tpu.concatenate %1, %2 in 1 : vector<16x1x128xf32>, vector<16x15x128xf32> -> vector<16x16x128xf32>
    %4 = vector.extract_strided_slice %0 {offsets = [0, 1, 0], sizes = [16, 15, 128], strides = [1, 1, 1]} : vector<16x16x128xf32> to vector<16x15x128xf32>
    %5 = tpu.concatenate %4, %1 in 1 : vector<16x15x128xf32>, vector<16x1x128xf32> -> vector<16x16x128xf32>
    %6 = arith.maximumf %0, %3 : vector<16x16x128xf32>
    %7 = arith.maximumf %6, %5 : vector<16x16x128xf32>
    %cst_2 = arith.constant 0xFF800000 : f32
    %8 = vector.broadcast %cst_2 : f32 to vector<1x16x128xf32>
    %9 = vector.extract_strided_slice %7 {offsets = [0, 0, 0], sizes = [15, 16, 128], strides = [1, 1, 1]} : vector<16x16x128xf32> to vector<15x16x128xf32>
    %10 = tpu.concatenate %8, %9 in 0 : vector<1x16x128xf32>, vector<15x16x128xf32> -> vector<16x16x128xf32>
    %11 = vector.extract_strided_slice %7 {offsets = [1, 0, 0], sizes = [15, 16, 128], strides = [1, 1, 1]} : vector<16x16x128xf32> to vector<15x16x128xf32>
    %12 = tpu.concatenate %11, %8 in 0 : vector<15x16x128xf32>, vector<1x16x128xf32> -> vector<16x16x128xf32>
    %13 = arith.maximumf %7, %10 : vector<16x16x128xf32>
    %14 = arith.maximumf %13, %12 : vector<16x16x128xf32>
    %c0_3 = arith.constant 0 : index
    %c0_4 = arith.constant 0 : index
    %c0_5 = arith.constant 0 : index
    %15 = vector.load %arg2[%c0_3, %c0_4, %c0_5] : memref<16x16x128xf32, #tpu.memory_space<vmem>>, vector<16x16x128xf32>
    tpu.vector_store %arg2[%c0_3, %c0_4, %c0_5], %14 {strides = array<i32>} : memref<16x16x128xf32, #tpu.memory_space<vmem>>, vector<16x16x128xf32>,
    return
  }
  func.func @transform_0(%arg0: i32) -> (i32, i32, i32) {
    %c0_i32 = arith.constant 0 : i32
    %c0_i32_0 = arith.constant 0 : i32
    %c0_i32_1 = arith.constant 0 : i32
    return %c0_i32, %c0_i32_0, %arg0 : i32, i32, i32
  }
  func.func @transform_1(%arg0: i32) -> (i32, i32, i32) {
    %c0_i32 = arith.constant 0 : i32
    %c0_i32_0 = arith.constant 0 : i32
    %c0_i32_1 = arith.constant 0 : i32
    return %c0_i32, %c0_i32_0, %arg0 : i32, i32, i32
  }
}

</mosaic_0001>

<llo_original>
// kernel: tpu_custom_call.1
$region0: #{tpu_custom_call.1}
  #allocation0 [shape = 'u32[]', space=smem, size = 0x4, offset = 0x4, fixed_abs, tag = 'smem constant byte address 0x4 - core index']
  #allocation1 [shape = 'u32[72,128]{1,0:T(1,128)}', space=vmem, size = 0x9000, scoped, tag = 'internal scratch']
  %s0 = inlined_call_operand.hbm [shape: f32[16,16,128], index: 0, kind: input, shape index: {}]
  %s1 = inlined_call_operand.hbm [shape: f32[16,16,128], index: 1, kind: output, shape index: {}]
  %s2 = sld [smem:[#allocation0]]
  $region18: #{tpu_custom_call.1} parent=0
    _
  %s4 = ssub.s32 1, %s2
  %s5 = scalar_select 0, %s4, %s2
  $region1: #{tpu_custom_call.1} parent=0
    #allocation2 [shape = 'u8[131072]{0}', space=vmem, size = 0x20000, scoped, tag = 'input window, operand 0, single buffered']
    #allocation3 [shape = 's32[1]{0}', space=sflag, size = 0x4, scoped, tag = 'scoped memory for tpu_custom_call.1']
    #allocation4 [shape = 's32[1]{0}', space=sflag, size = 0x4, scoped, tag = 'scoped memory for tpu_custom_call.1']
    #allocation5 [shape = 'u8[131072]{0}', space=vmem, size = 0x20000, scoped, tag = 'output window, operand 0, single buffered']
    %6 = vsyncpa [#allocation3], 0
    %7 = vsyncpa [#allocation4], 0
    // Predicated region
    $region2: #{tpu_custom_call.1} parent=1 // pred_check
      _
    $region3: #{tpu_custom_call.1} parent=1 // pred_check_branch
      %9 = sbr.rel (0) target = $region5
    $region4: #{tpu_custom_call.1} parent=1 // pred_region
      %11 = vsyncadd [#allocation3], 0
      %s12 = sshll.u32 %s0, 4
      %s13 = int_to_ptr.hbm [resolvable:$true] %s12
      %s14 = sshll.u32 [#allocation2], 4
      %s15 = int_to_ptr.vmem [resolvable:$true] %s14
      %20 = dma.hbm_to_vmem [thread:$0]  %s13, 4096, %s15, [#allocation3], 128, 128, 8
    $region5: #{tpu_custom_call.1} parent=1 // pred_fallthru
      _
    // Predicated region
    $region6: #{tpu_custom_call.1} parent=1 // pred_check
      _
    $region7: #{tpu_custom_call.1} parent=1 // pred_check_branch
      %22 = sbr.rel (0) target = $region9
    $region8: #{tpu_custom_call.1} parent=1 // pred_region
      %24 = dma.done [#allocation3], 4096
    $region9: #{tpu_custom_call.1} parent=1 // pred_fallthru
      _
    %v25 = vld [vmem:[#allocation2] sm:$0xff]
    %v26 = vld [vmem:[#allocation2 + $0x8] sm:$0xff]
    %v27 = vld [vmem:[#allocation2 + $0x10] sm:$0xff]
    %v28 = vld [vmem:[#allocation2 + $0x18] sm:$0xff]
    %v29 = vld [vmem:[#allocation2 + $0x20] sm:$0xff]
    %v30 = vld [vmem:[#allocation2 + $0x28] sm:$0xff]
    %v31 = vld [vmem:[#allocation2 + $0x30] sm:$0xff]
    %v32 = vld [vmem:[#allocation2 + $0x38] sm:$0xff]
    %v33 = vld [vmem:[#allocation2 + $0x40] sm:$0xff]
    %v34 = vld [vmem:[#allocation2 + $0x48] sm:$0xff]
    %v35 = vld [vmem:[#allocation2 + $0x50] sm:$0xff]
    %v36 = vld [vmem:[#allocation2 + $0x58] sm:$0xff]
    %v37 = vld [vmem:[#allocation2 + $0x60] sm:$0xff]
    %v38 = vld [vmem:[#allocation2 + $0x68] sm:$0xff]
    %v39 = vld [vmem:[#allocation2 + $0x70] sm:$0xff]
    %v40 = vld [vmem:[#allocation2 + $0x78] sm:$0xff]
    %v41 = vld [vmem:[#allocation2 + $0x80] sm:$0xff]
    %v42 = vld [vmem:[#allocation2 + $0x88] sm:$0xff]
    %v43 = vld [vmem:[#allocation2 + $0x90] sm:$0xff]
    %v44 = vld [vmem:[#allocation2 + $0x98] sm:$0xff]
    %v45 = vld [vmem:[#allocation2 + $0xa0] sm:$0xff]
    %v46 = vld [vmem:[#allocation2 + $0xa8] sm:$0xff]
    %v47 = vld [vmem:[#allocation2 + $0xb0] sm:$0xff]
    %v48 = vld [vmem:[#allocation2 + $0xb8] sm:$0xff]
    %v49 = vld [vmem:[#allocation2 + $0xc0] sm:$0xff]
    %v50 = vld [vmem:[#allocation2 + $0xc8] sm:$0xff]
    %v51 = vld [vmem:[#allocation2 + $0xd0] sm:$0xff]
    %v52 = vld [vmem:[#allocation2 + $0xd8] sm:$0xff]
    %v53 = vld [vmem:[#allocation2 + $0xe0] sm:$0xff]
    %v54 = vld [vmem:[#allocation2 + $0xe8] sm:$0xff]
    %v55 = vld [vmem:[#allocation2 + $0xf0] sm:$0xff]
    %v56 = vld [vmem:[#allocation2 + $0xf8] sm:$0xff]
    %vm89 = vcmask 1040384
    %v90 = vrot.slane %v25, 7
    %v91 = vrot.slane %v26, 7
    %v92 = vsel %vm89, %v90, %v91
    %v93 = vrot.slane %v27, 7
    %v94 = vrot.slane %v28, 7
    %v95 = vsel %vm89, %v93, %v94
    %v96 = vrot.slane %v29, 7
    %v97 = vrot.slane %v30, 7
    %v98 = vsel %vm89, %v96, %v97
    %v99 = vrot.slane %v31, 7
    %v100 = vrot.slane %v32, 7
    %v101 = vsel %vm89, %v99, %v100
    %v102 = vrot.slane %v33, 7
    %v103 = vrot.slane %v34, 7
    %v104 = vsel %vm89, %v102, %v103
    %v105 = vrot.slane %v35, 7
    %v106 = vrot.slane %v36, 7
    %v107 = vsel %vm89, %v105, %v106
    %v108 = vrot.slane %v37, 7
    %v109 = vrot.slane %v38, 7
    %v110 = vsel %vm89, %v108, %v109
    %v111 = vrot.slane %v39, 7
    %v112 = vrot.slane %v40, 7
    %v113 = vsel %vm89, %v111, %v112
    %v114 = vrot.slane %v41, 7
    %v115 = vrot.slane %v42, 7
    %v116 = vsel %vm89, %v114, %v115
    %v117 = vrot.slane %v43, 7
    %v118 = vrot.slane %v44, 7
    %v119 = vsel %vm89, %v117, %v118
    %v120 = vrot.slane %v45, 7
    %v121 = vrot.slane %v46, 7
    %v122 = vsel %vm89, %v120, %v121
    %v123 = vrot.slane %v47, 7
    %v124 = vrot.slane %v48, 7
    %v125 = vsel %vm89, %v123, %v124
    %v126 = vrot.slane %v49, 7
    %v127 = vrot.slane %v50, 7
    %v128 = vsel %vm89, %v126, %v127
    %v129 = vrot.slane %v51, 7
    %v130 = vrot.slane %v52, 7
    %v131 = vsel %vm89, %v129, %v130
    %v132 = vrot.slane %v53, 7
    %v133 = vrot.slane %v54, 7
    %v134 = vsel %vm89, %v132, %v133
    %v135 = vrot.slane %v55, 7
    %v136 = vrot.slane %v56, 7
    %v137 = vsel %vm89, %v135, %v136
    %v170 = vsel %vm89, -inf, %v90
    %v171 = vsel %vm89, -inf, %v93
    %v172 = vsel %vm89, -inf, %v96
    %v173 = vsel %vm89, -inf, %v99
    %v174 = vsel %vm89, -inf, %v102
    %v175 = vsel %vm89, -inf, %v105
    %v176 = vsel %vm89, -inf, %v108
    %v177 = vsel %vm89, -inf, %v111
    %v178 = vsel %vm89, -inf, %v114
    %v179 = vsel %vm89, -inf, %v117
    %v180 = vsel %vm89, -inf, %v120
    %v181 = vsel %vm89, -inf, %v123
    %v182 = vsel %vm89, -inf, %v126
    %v183 = vsel %vm89, -inf, %v129
    %v184 = vsel %vm89, -inf, %v132
    %v185 = vsel %vm89, -inf, %v135
    %vm186 = vcmask 1046528
    %v187 = vrot.slane %v25, 1
    %v188 = vrot.slane %v26, 1
    %v189 = vsel %vm186, %v187, %v188
    %v190 = vrot.slane %v27, 1
    %v191 = vrot.slane %v28, 1
    %v192 = vsel %vm186, %v190, %v191
    %v193 = vrot.slane %v29, 1
    %v194 = vrot.slane %v30, 1
    %v195 = vsel %vm186, %v193, %v194
    %v196 = vrot.slane %v31, 1
    %v197 = vrot.slane %v32, 1
    %v198 = vsel %vm186, %v196, %v197
    %v199 = vrot.slane %v33, 1
    %v200 = vrot.slane %v34, 1
    %v201 = vsel %vm186, %v199, %v200
    %v202 = vrot.slane %v35, 1
    %v203 = vrot.slane %v36, 1
    %v204 = vsel %vm186, %v202, %v203
    %v205 = vrot.slane %v37, 1
    %v206 = vrot.slane %v38, 1
    %v207 = vsel %vm186, %v205, %v206
    %v208 = vrot.slane %v39, 1
    %v209 = vrot.slane %v40, 1
    %v210 = vsel %vm186, %v208, %v209
    %v211 = vrot.slane %v41, 1
    %v212 = vrot.slane %v42, 1
    %v213 = vsel %vm186, %v211, %v212
    %v214 = vrot.slane %v43, 1
    %v215 = vrot.slane %v44, 1
    %v216 = vsel %vm186, %v214, %v215
    %v217 = vrot.slane %v45, 1
    %v218 = vrot.slane %v46, 1
    %v219 = vsel %vm186, %v217, %v218
    %v220 = vrot.slane %v47, 1
    %v221 = vrot.slane %v48, 1
    %v222 = vsel %vm186, %v220, %v221
    %v223 = vrot.slane %v49, 1
    %v224 = vrot.slane %v50, 1
    %v225 = vsel %vm186, %v223, %v224
    %v226 = vrot.slane %v51, 1
    %v227 = vrot.slane %v52, 1
    %v228 = vsel %vm186, %v226, %v227
    %v229 = vrot.slane %v53, 1
    %v230 = vrot.slane %v54, 1
    %v231 = vsel %vm186, %v229, %v230
    %v232 = vrot.slane %v55, 1
    %v233 = vrot.slane %v56, 1
    %v234 = vsel %vm186, %v232, %v233
    %v267 = vsel %vm186, %v188, -inf
    %v268 = vsel %vm186, %v191, -inf
    %v269 = vsel %vm186, %v194, -inf
    %v270 = vsel %vm186, %v197, -inf
    %v271 = vsel %vm186, %v200, -inf
    %v272 = vsel %vm186, %v203, -inf
    %v273 = vsel %vm186, %v206, -inf
    %v274 = vsel %vm186, %v209, -inf
    %v275 = vsel %vm186, %v212, -inf
    %v276 = vsel %vm186, %v215, -inf
    %v277 = vsel %vm186, %v218, -inf
    %v278 = vsel %vm186, %v221, -inf
    %v279 = vsel %vm186, %v224, -inf
    %v280 = vsel %vm186, %v227, -inf
    %v281 = vsel %vm186, %v230, -inf
    %v282 = vsel %vm186, %v233, -inf
    %v283 = vmax.f32 %v25, %v170
    %v284 = vmax.f32 %v26, %v92
    %v285 = vmax.f32 %v27, %v171
    %v286 = vmax.f32 %v28, %v95
    %v287 = vmax.f32 %v29, %v172
    %v288 = vmax.f32 %v30, %v98
    %v289 = vmax.f32 %v31, %v173
    %v290 = vmax.f32 %v32, %v101
    %v291 = vmax.f32 %v33, %v174
    %v292 = vmax.f32 %v34, %v104
    %v293 = vmax.f32 %v35, %v175
    %v294 = vmax.f32 %v36, %v107
    %v295 = vmax.f32 %v37, %v176
    %v296 = vmax.f32 %v38, %v110
    %v297 = vmax.f32 %v39, %v177
    %v298 = vmax.f32 %v40, %v113
    %v299 = vmax.f32 %v41, %v178
    %v300 = vmax.f32 %v42, %v116
    %v301 = vmax.f32 %v43, %v179
    %v302 = vmax.f32 %v44, %v119
    %v303 = vmax.f32 %v45, %v180
    %v304 = vmax.f32 %v46, %v122
    %v305 = vmax.f32 %v47, %v181
    %v306 = vmax.f32 %v48, %v125
    %v307 = vmax.f32 %v49, %v182
    %v308 = vmax.f32 %v50, %v128
    %v309 = vmax.f32 %v51, %v183
    %v310 = vmax.f32 %v52, %v131
    %v311 = vmax.f32 %v53, %v184
    %v312 = vmax.f32 %v54, %v134
    %v313 = vmax.f32 %v55, %v185
    %v314 = vmax.f32 %v56, %v137
    %v315 = vmax.f32 %v283, %v189
    %v316 = vmax.f32 %v284, %v267
    %v317 = vmax.f32 %v285, %v192
    %v318 = vmax.f32 %v286, %v268
    %v319 = vmax.f32 %v287, %v195
    %v320 = vmax.f32 %v288, %v269
    %v321 = vmax.f32 %v289, %v198
    %v322 = vmax.f32 %v290, %v270
    %v323 = vmax.f32 %v291, %v201
    %v324 = vmax.f32 %v292, %v271
    %v325 = vmax.f32 %v293, %v204
    %v326 = vmax.f32 %v294, %v272
    %v327 = vmax.f32 %v295, %v207
    %v328 = vmax.f32 %v296, %v273
    %v329 = vmax.f32 %v297, %v210
    %v330 = vmax.f32 %v298, %v274
    %v331 = vmax.f32 %v299, %v213
    %v332 = vmax.f32 %v300, %v275
    %v333 = vmax.f32 %v301, %v216
    %v334 = vmax.f32 %v302, %v276
    %v335 = vmax.f32 %v303, %v219
    %v336 = vmax.f32 %v304, %v277
    %v337 = vmax.f32 %v305, %v222
    %v338 = vmax.f32 %v306, %v278
    %v339 = vmax.f32 %v307, %v225
    %v340 = vmax.f32 %v308, %v279
    %v341 = vmax.f32 %v309, %v228
    %v342 = vmax.f32 %v310, %v280
    %v343 = vmax.f32 %v311, %v231
    %v344 = vmax.f32 %v312, %v281
    %v345 = vmax.f32 %v313, %v234
    %v346 = vmax.f32 %v314, %v282
    %v347 = vmax.f32 %v317, %v315
    %v348 = vmax.f32 %v318, %v316
    %v349 = vmax.f32 %v319, %v317
    %v350 = vmax.f32 %v320, %v318
    %v351 = vmax.f32 %v321, %v319
    %v352 = vmax.f32 %v322, %v320
    %v353 = vmax.f32 %v323, %v321
    %v354 = vmax.f32 %v324, %v322
    %v355 = vmax.f32 %v325, %v323
    %v356 = vmax.f32 %v326, %v324
    %v357 = vmax.f32 %v327, %v325
    %v358 = vmax.f32 %v328, %v326
    %v359 = vmax.f32 %v329, %v327
    %v360 = vmax.f32 %v330, %v328
    %v361 = vmax.f32 %v331, %v329
    %v362 = vmax.f32 %v332, %v330
    %v363 = vmax.f32 %v333, %v331
    %v364 = vmax.f32 %v334, %v332
    %v365 = vmax.f32 %v335, %v333
    %v366 = vmax.f32 %v336, %v334
    %v367 = vmax.f32 %v337, %v335
    %v368 = vmax.f32 %v338, %v336
    %v369 = vmax.f32 %v339, %v337
    %v370 = vmax.f32 %v340, %v338
    %v371 = vmax.f32 %v341, %v339
    %v372 = vmax.f32 %v342, %v340
    %v373 = vmax.f32 %v343, %v341
    %v374 = vmax.f32 %v344, %v342
    %v375 = vmax.f32 %v345, %v343
    %v376 = vmax.f32 %v346, %v344
    %v377 = vmax.f32 %v347, %v319
    %v378 = vmax.f32 %v348, %v320
    %v379 = vmax.f32 %v349, %v321
    %v380 = vmax.f32 %v350, %v322
    %v381 = vmax.f32 %v351, %v323
    %v382 = vmax.f32 %v352, %v324
    %v383 = vmax.f32 %v353, %v325
    %v384 = vmax.f32 %v354, %v326
    %v385 = vmax.f32 %v355, %v327
    %v386 = vmax.f32 %v356, %v328
    %v387 = vmax.f32 %v357, %v329
    %v388 = vmax.f32 %v358, %v330
    %v389 = vmax.f32 %v359, %v331
    %v390 = vmax.f32 %v360, %v332
    %v391 = vmax.f32 %v361, %v333
    %v392 = vmax.f32 %v362, %v334
    %v393 = vmax.f32 %v363, %v335
    %v394 = vmax.f32 %v364, %v336
    %v395 = vmax.f32 %v365, %v337
    %v396 = vmax.f32 %v366, %v338
    %v397 = vmax.f32 %v367, %v339
    %v398 = vmax.f32 %v368, %v340
    %v399 = vmax.f32 %v369, %v341
    %v400 = vmax.f32 %v370, %v342
    %v401 = vmax.f32 %v371, %v343
    %v402 = vmax.f32 %v372, %v344
    %v403 = vmax.f32 %v373, %v345
    %v404 = vmax.f32 %v374, %v346
    %405 = vst [vmem:[#allocation5] sm:$0xff] %v347
    %406 = vst [vmem:[#allocation5 + $0x8] sm:$0xff] %v348
    %407 = vst [vmem:[#allocation5 + $0x10] sm:$0xff] %v377
    %408 = vst [vmem:[#allocation5 + $0x18] sm:$0xff] %v378
    %409 = vst [vmem:[#allocation5 + $0x20] sm:$0xff] %v379
    %410 = vst [vmem:[#allocation5 + $0x28] sm:$0xff] %v380
    %411 = vst [vmem:[#allocation5 + $0x30] sm:$0xff] %v381
    %412 = vst [vmem:[#allocation5 + $0x38] sm:$0xff] %v382
    %413 = vst [vmem:[#allocation5 + $0x40] sm:$0xff] %v383
    %414 = vst [vmem:[#allocation5 + $0x48] sm:$0xff] %v384
    %415 = vst [vmem:[#allocation5 + $0x50] sm:$0xff] %v385
    %416 = vst [vmem:[#allocation5 + $0x58] sm:$0xff] %v386
    %417 = vst [vmem:[#allocation5 + $0x60] sm:$0xff] %v387
    %418 = vst [vmem:[#allocation5 + $0x68] sm:$0xff] %v388
    %419 = vst [vmem:[#allocation5 + $0x70] sm:$0xff] %v389
    %420 = vst [vmem:[#allocation5 + $0x78] sm:$0xff] %v390
    %421 = vst [vmem:[#allocation5 + $0x80] sm:$0xff] %v391
    %422 = vst [vmem:[#allocation5 + $0x88] sm:$0xff] %v392
    %423 = vst [vmem:[#allocation5 + $0x90] sm:$0xff] %v393
    %424 = vst [vmem:[#allocation5 + $0x98] sm:$0xff] %v394
    %425 = vst [vmem:[#allocation5 + $0xa0] sm:$0xff] %v395
    %426 = vst [vmem:[#allocation5 + $0xa8] sm:$0xff] %v396
    %427 = vst [vmem:[#allocation5 + $0xb0] sm:$0xff] %v397
    %428 = vst [vmem:[#allocation5 + $0xb8] sm:$0xff] %v398
    %429 = vst [vmem:[#allocation5 + $0xc0] sm:$0xff] %v399
    %430 = vst [vmem:[#allocation5 + $0xc8] sm:$0xff] %v400
    %431 = vst [vmem:[#allocation5 + $0xd0] sm:$0xff] %v401
    %432 = vst [vmem:[#allocation5 + $0xd8] sm:$0xff] %v402
    %433 = vst [vmem:[#allocation5 + $0xe0] sm:$0xff] %v403
    %434 = vst [vmem:[#allocation5 + $0xe8] sm:$0xff] %v404
    %435 = vst [vmem:[#allocation5 + $0xf0] sm:$0xff] %v375
    %436 = vst [vmem:[#allocation5 + $0xf8] sm:$0xff] %v376
    // Predicated region
    $region10: #{tpu_custom_call.1} parent=1 // pred_check
      _
    $region11: #{tpu_custom_call.1} parent=1 // pred_check_branch
      %438 = sbr.rel (0) target = $region13
    $region12: #{tpu_custom_call.1} parent=1 // pred_region
      %440 = vsyncadd [#allocation4], 0
      %s441 = sshll.u32 [#allocation5], 4
      %s442 = int_to_ptr.vmem [resolvable:$true] %s441
      %s443 = sshll.u32 %s1, 4
      %s444 = int_to_ptr.hbm [resolvable:$true] %s443
      %449 = dma.vmem_to_hbm [thread:$0]  %s442, 4096, %s444, [#allocation4], 128, 128, 8
    $region13: #{tpu_custom_call.1} parent=1 // pred_fallthru
      _
    // Predicated region
    $region14: #{tpu_custom_call.1} parent=1 // pred_check
      _
    $region15: #{tpu_custom_call.1} parent=1 // pred_check_branch
      %451 = sbr.rel (0) target = $region17
    $region16: #{tpu_custom_call.1} parent=1 // pred_region
      %453 = dma.done [#allocation4], 4096
    $region17: #{tpu_custom_call.1} parent=1 // pred_fallthru
      _
    %454 = vsyncpa [#allocation3], 1
    %455 = vsyncpa [#allocation4], 1

</llo_original>
